<compile_context>
chip_gen: v7x
topology: tpu7x:2x2x1
jax: 0.10.0
libtpu: 0.0.40
codegen_flags: <defaults>
</compile_context>

<pallas_src>
import functools

import jax
import jax.numpy as jnp
from jax.experimental import pallas as pl
from jax.experimental.pallas import tpu as pltpu

LANES = 128  # lane-dense padded decoder width / padded action-space width


# ----------------------------- Pallas kernel --------------------------------
def _controller_chain_kernel(dids_ref, offs_ref, nouts_ref,          # scalar prefetch (SMEM)
                             seeds_ref, emb_ref, wih_ref, whh_ref, b_ref,
                             wdec_ref, bdec_ref,                     # inputs (VMEM)
                             h_ref, c_ref, logits_ref,               # outputs
                             x1h_ref,                                # scratch (VMEM)
                             *, hidden_size, lanes):
    """Runs one step of:  x = emb[idx]; (h,c) = LSTMCell(x,(h,c)); logits = W_dec(h);
       idx = argmax(logits) + offset   -- chained across the whole grid."""
    s = pl.program_id(0)
    H = hidden_size
    B = h_ref.shape[0]
    lane = jax.lax.broadcasted_iota(jnp.int32, (B, lanes), 1)
    lane_f = lane.astype(jnp.float32)

    # ---- init carried state on the first step -------------------------------
    @pl.when(s == 0)
    def _():
        h_ref[...] = jnp.zeros_like(h_ref)
        c_ref[...] = jnp.zeros_like(c_ref)
        # one-hot of the seed action, per batch row (padded to 128 lanes)
        x1h_ref[...] = (lane == seeds_ref[...]).astype(jnp.float32)

    # ---- embedding lookup as one-hot @ table (stays fully in vector land) ----
    x = jnp.dot(x1h_ref[...], emb_ref[...],
                preferred_element_type=jnp.float32)                  # (B, E)

    h = h_ref[...]
    c = c_ref[...]

    # ---- LSTMCell gates: x @ W_ih + h @ W_hh + (b_ih + b_hh) ----------------
    gates = (jnp.dot(x, wih_ref[...], preferred_element_type=jnp.float32)
             + jnp.dot(h, whh_ref[...], preferred_element_type=jnp.float32)
             + b_ref[...])                                           # (B, 4H)

    # one full-vreg sigmoid pass; tanh only on the g slice
    sig = jax.nn.sigmoid(gates)
    i_g = sig[:, 0 * H:1 * H]
    f_g = sig[:, 1 * H:2 * H]
    o_g = sig[:, 3 * H:4 * H]
    g_g = jnp.tanh(gates[:, 2 * H:3 * H])

    c_new = f_g * c + i_g * g_g
    h_new = o_g * jnp.tanh(c_new)
    h_ref[...] = h_new
    c_ref[...] = c_new

    # ---- decoder (active decoder block DMA'd via scalar-prefetch index_map) --
    logits = (jnp.dot(h_new, wdec_ref[...], preferred_element_type=jnp.float32)
              + bdec_ref[...])                                       # (B, 128)

    n_out = nouts_ref[s]
    masked = jnp.where(lane < n_out, logits, -1e30)                  # kill padded lanes
    logits_ref[...] = masked

    # ---- greedy argmax (first max) per row, vector-only; build next one-hot --
    mx = jnp.max(masked, axis=-1, keepdims=True)                     # (B, 1)
    cand = jnp.where(masked == mx, lane_f, float(lanes))
    action = jnp.min(cand, axis=-1, keepdims=True)                   # (B, 1) exact small int
    nxt = action + offs_ref[s].astype(jnp.float32)
    x1h_ref[...] = (lane_f == nxt).astype(jnp.float32)


# ------------------------------- Wrapper -------------------------------------
def controller_sample_chain(seeds, dec_ids, offsets, n_outs,
                            emb_pad, w_ih, w_hh, b_lstm, wdec_stack, bdec_stack):
    """Fused multi-step Controller chain.

    seeds:      (B, 1) int32  -- initial action index per rollout
    dec_ids:    (S,)  int32   -- which decoder each step uses
    offsets:    (S,)  int32   -- offset added to the chosen action to form next input
    n_outs:     (S,)  int32   -- valid logits width of that decoder
    emb_pad:    (128, E)      -- embedding table zero-padded to 128 rows
    w_ih:       (E, 4H), w_hh: (H, 4H), b_lstm: (1, 4H)
    wdec_stack: (D, H, 128),  bdec_stack: (D, 1, 128)  -- lane-padded decoders
    Returns (h_final (B,H), c_final (B,H), logits (S, B, 128))."""
    B = seeds.shape[0]
    H = w_hh.shape[0]
    num_steps = int(dec_ids.shape[0])

    kernel = functools.partial(_controller_chain_kernel, hidden_size=H, lanes=LANES)

    grid_spec = pltpu.PrefetchScalarGridSpec(
        num_scalar_prefetch=3,
        grid=(num_steps,),
        in_specs=[
            pl.BlockSpec((B, 1), lambda s, d, o, n: (0, 0)),                 # seeds
            pl.BlockSpec(emb_pad.shape, lambda s, d, o, n: (0, 0)),          # embedding
            pl.BlockSpec(w_ih.shape, lambda s, d, o, n: (0, 0)),             # W_ih
            pl.BlockSpec(w_hh.shape, lambda s, d, o, n: (0, 0)),             # W_hh
            pl.BlockSpec(b_lstm.shape, lambda s, d, o, n: (0, 0)),           # b
            pl.BlockSpec((None, H, LANES), lambda s, d, o, n: (d[s], 0, 0)),  # active W_dec
            pl.BlockSpec((None, 1, LANES), lambda s, d, o, n: (d[s], 0, 0)),  # active b_dec
        ],
        out_specs=[
            pl.BlockSpec((B, H), lambda s, d, o, n: (0, 0)),                 # h (resident)
            pl.BlockSpec((B, H), lambda s, d, o, n: (0, 0)),                 # c (resident)
            pl.BlockSpec((None, B, LANES), lambda s, d, o, n: (s, 0, 0)),    # per-step logits
        ],
        scratch_shapes=[pltpu.VMEM((B, LANES), jnp.float32)],                # next-input one-hot
    )
    out_shapes = (
        jax.ShapeDtypeStruct((B, H), jnp.float32),
        jax.ShapeDtypeStruct((B, H), jnp.float32),
        jax.ShapeDtypeStruct((num_steps, B, LANES), jnp.float32),
    )
    return pl.pallas_call(
        kernel,
        grid_spec=grid_spec,
        out_shape=out_shapes,
        compiler_params=pltpu.CompilerParams(dimension_semantics=("arbitrary",)),
    )(dec_ids, offsets, n_outs, seeds, emb_pad, w_ih, w_hh, b_lstm, wdec_stack, bdec_stack)


# --------------------------- Pure-JAX reference ------------------------------
def reference_chain(seeds, dec_ids, offsets, n_outs,
                    emb_pad, w_ih, w_hh, b_lstm, wdec_stack, bdec_stack, H):
    B = seeds.shape[0]
    h = jnp.zeros((B, H), jnp.float32)
    c = jnp.zeros((B, H), jnp.float32)
    idx = seeds.reshape(B).astype(jnp.int32)
    logits_steps = []
    for s in range(int(dec_ids.shape[0])):
        x = emb_pad[idx]                                     # (B, E)
        gates = x @ w_ih + h @ w_hh + b_lstm
        i_g = jax.nn.sigmoid(gates[:, 0 * H:1 * H])
        f_g = jax.nn.sigmoid(gates[:, 1 * H:2 * H])
        g_g = jnp.tanh(gates[:, 2 * H:3 * H])
        o_g = jax.nn.sigmoid(gates[:, 3 * H:4 * H])
        c = f_g * c + i_g * g_g
        h = o_g * jnp.tanh(c)
        d = int(dec_ids[s])
        n = int(n_outs[s])
        logits = h @ wdec_stack[d][:, :n] + bdec_stack[d][:, :n]   # (B, n)
        logits_steps.append(logits)
        action = jnp.argmax(logits, axis=-1).astype(jnp.int32)
        idx = action + int(offsets[s])
    return h, c, logits_steps


# --------------------------------- Main ---------------------------------------
if __name__ == "__main__":
    # Controller hyperparameters (small shapes matching the PyTorch module).
    embedding_size = 16
    hidden_size = 32
    num_exps, num_ker, num_l, num_se = 3, 2, 3, 2
    num_actions = num_exps + num_ker + num_l + 1 + num_se    # = 11
    seed_action = 2
    B = 8                                                    # batched rollouts (fills sublanes)

    key = jax.random.PRNGKey(0)
    ks = jax.random.split(key, 16)
    init_range = 0.1
    u = lambda k, shape: jax.random.uniform(k, shape, jnp.float32, -init_range, init_range)

    # Parameters (deterministic init mimicking Controller.init_parameters).
    emb = u(ks[0], (num_actions, embedding_size))
    emb_pad = jnp.zeros((LANES, embedding_size), jnp.float32).at[:num_actions].set(emb)

    # LSTMCell weights, pre-transposed to [in, 4H]; combined bias (b_ih + b_hh).
    w_ih = u(ks[1], (embedding_size, 4 * hidden_size))
    w_hh = u(ks[2], (hidden_size, 4 * hidden_size))
    b_lstm = u(ks[3], (1, 4 * hidden_size)) + u(ks[4], (1, 4 * hidden_size))

    # Decoders stacked & zero-padded to 128 lanes: [e, k, l1, l2, se]; biases = 0.
    dec_sizes = [num_exps, num_ker, num_l, num_l + 1, num_se]
    wdec_stack = jnp.zeros((len(dec_sizes), hidden_size, LANES), jnp.float32)
    for d, n in enumerate(dec_sizes):
        wdec_stack = wdec_stack.at[d, :, :n].set(u(ks[5 + d], (hidden_size, n)))
    bdec_stack = jnp.zeros((len(dec_sizes), 1, LANES), jnp.float32)

    # sample() schedule: 7 layers x (e, k, l1|l2, se)  -> 28 steps in one kernel call.
    dec_ids_l, offs_l, nouts_l = [], [], []
    for lay in range(7):
        dec_ids_l += [0, 1, 2 if lay != 5 else 3, 4]
        offs_l += [0, num_exps, num_exps + num_ker, num_exps + num_ker + num_l + 1]
        nouts_l += [num_exps, num_ker, num_l if lay != 5 else num_l + 1, num_se]
    dec_ids = jnp.array(dec_ids_l, jnp.int32)
    offsets = jnp.array(offs_l, jnp.int32)
    n_outs = jnp.array(nouts_l, jnp.int32)
    num_steps = int(dec_ids.shape[0])

    # Per-rollout seed actions (module default is 2; vary some rows to exercise divergence).
    seeds = jnp.array([[seed_action], [0], [5], [seed_action],
                       [7], [1], [9], [3]], jnp.int32)

    # --- fused Pallas chain ----------------------------------------------------
    h_k, c_k, logits_k = controller_sample_chain(
        seeds, dec_ids, offsets, n_outs,
        emb_pad, w_ih, w_hh, b_lstm, wdec_stack, bdec_stack)
    jax.block_until_ready((h_k, c_k, logits_k))

    # --- pure-JAX reference (same greedy chaining) -----------------------------
    h_r, c_r, logits_r = reference_chain(
        seeds, dec_ids, offsets, n_outs,
        emb_pad, w_ih, w_hh, b_lstm, wdec_stack, bdec_stack, hidden_size)

    ok = bool(jnp.allclose(h_k, h_r, atol=1e-5)) and bool(jnp.allclose(c_k, c_r, atol=1e-5))
    for s in range(num_steps):
        n = int(n_outs[s])
        ok = ok and bool(jnp.allclose(logits_k[s, :, :n], logits_r[s], atol=1e-5))

    assert ok, "Pallas kernel disagrees with reference"
    print("KERNEL_OK")
</pallas_src>

<mosaic_0001>
module attributes {stable_mosaic.version = 11 : i64} {
  func.func @_controller_chain_kernel(%arg0: i32, %arg1: memref<28xi32, #tpu.memory_space<smem>>, %arg2: memref<28xi32, #tpu.memory_space<smem>>, %arg3: memref<28xi32, #tpu.memory_space<smem>>, %arg4: memref<8x1xi32, #tpu.memory_space<vmem>>, %arg5: memref<128x16xf32, #tpu.memory_space<vmem>>, %arg6: memref<16x128xf32, #tpu.memory_space<vmem>>, %arg7: memref<32x128xf32, #tpu.memory_space<vmem>>, %arg8: memref<1x128xf32, #tpu.memory_space<vmem>>, %arg9: memref<1x32x128xf32, #tpu.memory_space<vmem>>, %arg10: memref<1x1x128xf32, #tpu.memory_space<vmem>>, %arg11: memref<8x32xf32, #tpu.memory_space<vmem>>, %arg12: memref<8x32xf32, #tpu.memory_space<vmem>>, %arg13: memref<1x8x128xf32, #tpu.memory_space<vmem>>, %arg14: memref<8x128xf32, #tpu.memory_space<vmem>>) attributes {dimension_semantics = [#tpu.dimension_semantics<arbitrary>], iteration_bounds = array<i64: 28>, scalar_prefetch = 3 : i64, scratch_operands = 1 : i64, tpu.core_type = #tpu.core_type<tc>, window_params = [{pipeline_mode = #tpu.pipeline_mode<synchronous>, transform_indices = @transform_0, window_bounds = array<i64: 8, 1>}, {pipeline_mode = #tpu.pipeline_mode<synchronous>, transform_indices = @transform_1, window_bounds = array<i64: 128, 16>}, {pipeline_mode = #tpu.pipeline_mode<synchronous>, transform_indices = @transform_2, window_bounds = array<i64: 16, 128>}, {pipeline_mode = #tpu.pipeline_mode<synchronous>, transform_indices = @transform_3, window_bounds = array<i64: 32, 128>}, {pipeline_mode = #tpu.pipeline_mode<synchronous>, transform_indices = @transform_4, window_bounds = array<i64: 1, 128>}, {transform_indices = @transform_5, window_bounds = array<i64: 1, 32, 128>}, {transform_indices = @transform_6, window_bounds = array<i64: 1, 1, 128>}, {pipeline_mode = #tpu.pipeline_mode<synchronous>, transform_indices = @transform_7, window_bounds = array<i64: 8, 32>}, {pipeline_mode = #tpu.pipeline_mode<synchronous>, transform_indices = @transform_8, window_bounds = array<i64: 8, 32>}, {transform_indices = @transform_9, window_bounds = array<i64: 1, 8, 128>}]} {
    %0 = tpu.iota {dimensions = array<i32: 1>} : vector<8x128xi32>
    %1 = arith.sitofp %0 : vector<8x128xi32> to vector<8x128xf32>
    %c0_i32 = arith.constant 0 : i32
    %2 = arith.cmpi eq, %arg0, %c0_i32 : i32
    %3 = arith.extui %2 : i1 to i32
    %c0_i32_0 = arith.constant 0 : i32
    %4 = arith.cmpi ne, %3, %c0_i32_0 : i32
    scf.if %4 {
      %cst_37 = arith.constant 0.000000e+00 : f32
      %69 = vector.broadcast %cst_37 : f32 to vector<8x32xf32>
      %c0_38 = arith.constant 0 : index
      %c0_39 = arith.constant 0 : index
      %70 = vector.load %arg11[%c0_38, %c0_39] : memref<8x32xf32, #tpu.memory_space<vmem>>, vector<8x32xf32>
      tpu.vector_store %arg11[%c0_38, %c0_39], %69 {strides = array<i32>} : memref<8x32xf32, #tpu.memory_space<vmem>>, vector<8x32xf32>,
      %cst_40 = arith.constant 0.000000e+00 : f32
      %71 = vector.broadcast %cst_40 : f32 to vector<8x32xf32>
      %c0_41 = arith.constant 0 : index
      %c0_42 = arith.constant 0 : index
      %72 = vector.load %arg12[%c0_41, %c0_42] : memref<8x32xf32, #tpu.memory_space<vmem>>, vector<8x32xf32>
      tpu.vector_store %arg12[%c0_41, %c0_42], %71 {strides = array<i32>} : memref<8x32xf32, #tpu.memory_space<vmem>>, vector<8x32xf32>,
      %c0_43 = arith.constant 0 : index
      %c0_44 = arith.constant 0 : index
      %73 = vector.load %arg4[%c0_43, %c0_44] : memref<8x1xi32, #tpu.memory_space<vmem>>, vector<8x1xi32>
      %74 = vector.broadcast %73 : vector<8x1xi32> to vector<8x128xi32>
      %75 = arith.cmpi eq, %0, %74 : vector<8x128xi32>
      %76 = arith.extui %75 : vector<8x128xi1> to vector<8x128xi32>
      %77 = arith.sitofp %76 : vector<8x128xi32> to vector<8x128xf32>
      %c0_45 = arith.constant 0 : index
      %c0_46 = arith.constant 0 : index
      %78 = vector.load %arg14[%c0_45, %c0_46] : memref<8x128xf32, #tpu.memory_space<vmem>>, vector<8x128xf32>
      tpu.vector_store %arg14[%c0_45, %c0_46], %77 {strides = array<i32>} : memref<8x128xf32, #tpu.memory_space<vmem>>, vector<8x128xf32>,
    } else {
    }
    %c0 = arith.constant 0 : index
    %c0_1 = arith.constant 0 : index
    %5 = vector.load %arg14[%c0, %c0_1] : memref<8x128xf32, #tpu.memory_space<vmem>>, vector<8x128xf32>
    %c0_2 = arith.constant 0 : index
    %c0_3 = arith.constant 0 : index
    %6 = vector.load %arg5[%c0_2, %c0_3] : memref<128x16xf32, #tpu.memory_space<vmem>>, vector<128x16xf32>
    %cst = arith.constant dense<0.000000e+00> : vector<8x16xf32>
    %7 = tpu.matmul %5, %6, %cst {dimension_numbers = #tpu.dot_dimension_numbers<[1], [0], [0], [1], [0, 0, 1, 1], [], []>} : vector<8x128xf32>, vector<128x16xf32>, vector<8x16xf32> -> vector<8x16xf32>
    %c0_4 = arith.constant 0 : index
    %c0_5 = arith.constant 0 : index
    %8 = vector.load %arg11[%c0_4, %c0_5] : memref<8x32xf32, #tpu.memory_space<vmem>>, vector<8x32xf32>
    %c0_6 = arith.constant 0 : index
    %c0_7 = arith.constant 0 : index
    %9 = vector.load %arg12[%c0_6, %c0_7] : memref<8x32xf32, #tpu.memory_space<vmem>>, vector<8x32xf32>
    %c0_8 = arith.constant 0 : index
    %c0_9 = arith.constant 0 : index
    %10 = vector.load %arg6[%c0_8, %c0_9] : memref<16x128xf32, #tpu.memory_space<vmem>>, vector<16x128xf32>
    %cst_10 = arith.constant dense<0.000000e+00> : vector<8x128xf32>
    %11 = tpu.matmul %7, %10, %cst_10 {dimension_numbers = #tpu.dot_dimension_numbers<[1], [0], [0], [1], [0, 0, 1, 1], [], []>} : vector<8x16xf32>, vector<16x128xf32>, vector<8x128xf32> -> vector<8x128xf32>
    %c0_11 = arith.constant 0 : index
    %c0_12 = arith.constant 0 : index
    %12 = vector.load %arg7[%c0_11, %c0_12] : memref<32x128xf32, #tpu.memory_space<vmem>>, vector<32x128xf32>
    %cst_13 = arith.constant dense<0.000000e+00> : vector<8x128xf32>
    %13 = tpu.matmul %8, %12, %cst_13 {dimension_numbers = #tpu.dot_dimension_numbers<[1], [0], [0], [1], [0, 0, 1, 1], [], []>} : vector<8x32xf32>, vector<32x128xf32>, vector<8x128xf32> -> vector<8x128xf32>
    %14 = arith.addf %11, %13 : vector<8x128xf32>
    %c0_14 = arith.constant 0 : index
    %c0_15 = arith.constant 0 : index
    %15 = vector.load %arg8[%c0_14, %c0_15] : memref<1x128xf32, #tpu.memory_space<vmem>>, vector<1x128xf32>
    %16 = vector.broadcast %15 : vector<1x128xf32> to vector<8x128xf32>
    %17 = arith.addf %14, %16 : vector<8x128xf32>
    %18 = arith.negf %17 : vector<8x128xf32>
    %19 = math.exp %18 : vector<8x128xf32>
    %cst_16 = arith.constant 1.000000e+00 : f32
    %20 = vector.broadcast %cst_16 : f32 to vector<8x128xf32>
    %21 = arith.addf %20, %19 : vector<8x128xf32>
    %22 = arith.divf %20, %21 : vector<8x128xf32>
    %23 = vector.extract_strided_slice %22 {offsets = [0, 0], sizes = [8, 32], strides = [1, 1]} : vector<8x128xf32> to vector<8x32xf32>
    %24 = vector.extract_strided_slice %22 {offsets = [0, 32], sizes = [8, 32], strides = [1, 1]} : vector<8x128xf32> to vector<8x32xf32>
    %25 = vector.extract_strided_slice %22 {offsets = [0, 96], sizes = [8, 32], strides = [1, 1]} : vector<8x128xf32> to vector<8x32xf32>
    %26 = vector.extract_strided_slice %17 {offsets = [0, 64], sizes = [8, 32], strides = [1, 1]} : vector<8x128xf32> to vector<8x32xf32>
    %27 = math.tanh %26 : vector<8x32xf32>
    %28 = arith.mulf %24, %9 : vector<8x32xf32>
    %29 = arith.mulf %23, %27 : vector<8x32xf32>
    %30 = arith.addf %28, %29 : vector<8x32xf32>
    %31 = math.tanh %30 : vector<8x32xf32>
    %32 = arith.mulf %25, %31 : vector<8x32xf32>
    %c0_17 = arith.constant 0 : index
    %c0_18 = arith.constant 0 : index
    %33 = vector.load %arg11[%c0_17, %c0_18] : memref<8x32xf32, #tpu.memory_space<vmem>>, vector<8x32xf32>
    tpu.vector_store %arg11[%c0_17, %c0_18], %32 {strides = array<i32>} : memref<8x32xf32, #tpu.memory_space<vmem>>, vector<8x32xf32>,
    %c0_19 = arith.constant 0 : index
    %c0_20 = arith.constant 0 : index
    %34 = vector.load %arg12[%c0_19, %c0_20] : memref<8x32xf32, #tpu.memory_space<vmem>>, vector<8x32xf32>
    tpu.vector_store %arg12[%c0_19, %c0_20], %30 {strides = array<i32>} : memref<8x32xf32, #tpu.memory_space<vmem>>, vector<8x32xf32>,
    %c0_21 = arith.constant 0 : index
    %c0_22 = arith.constant 0 : index
    %c0_23 = arith.constant 0 : index
    %35 = vector.load %arg9[%c0_21, %c0_22, %c0_23] : memref<1x32x128xf32, #tpu.memory_space<vmem>>, vector<1x32x128xf32>
    %36 = vector.shape_cast %35 : vector<1x32x128xf32> to vector<32x128xf32>
    %cst_24 = arith.constant dense<0.000000e+00> : vector<8x128xf32>
    %37 = tpu.matmul %32, %36, %cst_24 {dimension_numbers = #tpu.dot_dimension_numbers<[1], [0], [0], [1], [0, 0, 1, 1], [], []>} : vector<8x32xf32>, vector<32x128xf32>, vector<8x128xf32> -> vector<8x128xf32>
    %c0_25 = arith.constant 0 : index
    %c0_26 = arith.constant 0 : index
    %c0_27 = arith.constant 0 : index
    %38 = vector.load %arg10[%c0_25, %c0_26, %c0_27] : memref<1x1x128xf32, #tpu.memory_space<vmem>>, vector<1x1x128xf32>
    %39 = vector.shape_cast %38 : vector<1x1x128xf32> to vector<1x128xf32>
    %40 = vector.broadcast %39 : vector<1x128xf32> to vector<8x128xf32>
    %41 = arith.addf %37, %40 : vector<8x128xf32>
    %42 = arith.index_cast %arg0 : i32 to index
    %43 = memref.load %arg3[%42] : memref<28xi32, #tpu.memory_space<smem>>
    %44 = vector.broadcast %43 : i32 to vector<8x128xi32>
    %45 = arith.cmpi slt, %0, %44 : vector<8x128xi32>
    %cst_28 = arith.constant -1.000000e+30 : f32
    %46 = vector.broadcast %cst_28 : f32 to vector<8x128xf32>
    %47 = arith.select %45, %41, %46 : vector<8x128xi1>, vector<8x128xf32>
    %c0_29 = arith.constant 0 : index
    %c0_30 = arith.constant 0 : index
    %c0_31 = arith.constant 0 : index
    %48 = vector.load %arg13[%c0_29, %c0_30, %c0_31] : memref<1x8x128xf32, #tpu.memory_space<vmem>>, vector<1x8x128xf32>
    %49 = vector.shape_cast %48 : vector<1x8x128xf32> to vector<8x128xf32>
    %50 = vector.shape_cast %47 : vector<8x128xf32> to vector<1x8x128xf32>
    tpu.vector_store %arg13[%c0_29, %c0_30, %c0_31], %50 {strides = array<i32>} : memref<1x8x128xf32, #tpu.memory_space<vmem>>, vector<1x8x128xf32>,
    %cst_32 = arith.constant dense<0xFF800000> : vector<8xf32>
    %51 = vector.multi_reduction <maximumf>, %47, %cst_32 [1] : vector<8x128xf32> to vector<8xf32>
    %52 = vector.shape_cast %51 : vector<8xf32> to vector<8x1xf32>
    %53 = vector.broadcast %52 : vector<8x1xf32> to vector<8x128xf32>
    %54 = arith.cmpf oeq, %47, %53 : vector<8x128xf32>
    %cst_33 = arith.constant 1.280000e+02 : f32
    %55 = vector.broadcast %cst_33 : f32 to vector<8x128xf32>
    %56 = arith.select %54, %1, %55 : vector<8x128xi1>, vector<8x128xf32>
    %cst_34 = arith.constant dense<0x7F800000> : vector<8xf32>
    %57 = vector.multi_reduction <minimumf>, %56, %cst_34 [1] : vector<8x128xf32> to vector<8xf32>
    %58 = vector.shape_cast %57 : vector<8xf32> to vector<8x1xf32>
    %59 = arith.index_cast %arg0 : i32 to index
    %60 = memref.load %arg2[%59] : memref<28xi32, #tpu.memory_space<smem>>
    %61 = arith.sitofp %60 : i32 to f32
    %62 = vector.broadcast %61 : f32 to vector<8x1xf32>
    %63 = arith.addf %58, %62 : vector<8x1xf32>
    %64 = vector.broadcast %63 : vector<8x1xf32> to vector<8x128xf32>
    %65 = arith.cmpf oeq, %1, %64 : vector<8x128xf32>
    %66 = arith.extui %65 : vector<8x128xi1> to vector<8x128xi32>
    %67 = arith.sitofp %66 : vector<8x128xi32> to vector<8x128xf32>
    %c0_35 = arith.constant 0 : index
    %c0_36 = arith.constant 0 : index
    %68 = vector.load %arg14[%c0_35, %c0_36] : memref<8x128xf32, #tpu.memory_space<vmem>>, vector<8x128xf32>
    tpu.vector_store %arg14[%c0_35, %c0_36], %67 {strides = array<i32>} : memref<8x128xf32, #tpu.memory_space<vmem>>, vector<8x128xf32>,
    return
  }
  func.func @transform_0(%arg0: i32, %arg1: memref<28xi32, #tpu.memory_space<smem>>, %arg2: memref<28xi32, #tpu.memory_space<smem>>, %arg3: memref<28xi32, #tpu.memory_space<smem>>) -> (i32, i32) {
    %c0_i32 = arith.constant 0 : i32
    %c0_i32_0 = arith.constant 0 : i32
    %c0_i32_1 = arith.constant 0 : i32
    return %c0_i32, %c0_i32_0 : i32, i32
  }
  func.func @transform_1(%arg0: i32, %arg1: memref<28xi32, #tpu.memory_space<smem>>, %arg2: memref<28xi32, #tpu.memory_space<smem>>, %arg3: memref<28xi32, #tpu.memory_space<smem>>) -> (i32, i32) {
    %c0_i32 = arith.constant 0 : i32
    %c0_i32_0 = arith.constant 0 : i32
    %c0_i32_1 = arith.constant 0 : i32
    return %c0_i32, %c0_i32_0 : i32, i32
  }
  func.func @transform_2(%arg0: i32, %arg1: memref<28xi32, #tpu.memory_space<smem>>, %arg2: memref<28xi32, #tpu.memory_space<smem>>, %arg3: memref<28xi32, #tpu.memory_space<smem>>) -> (i32, i32) {
    %c0_i32 = arith.constant 0 : i32
    %c0_i32_0 = arith.constant 0 : i32
    %c0_i32_1 = arith.constant 0 : i32
    return %c0_i32, %c0_i32_0 : i32, i32
  }
  func.func @transform_3(%arg0: i32, %arg1: memref<28xi32, #tpu.memory_space<smem>>, %arg2: memref<28xi32, #tpu.memory_space<smem>>, %arg3: memref<28xi32, #tpu.memory_space<smem>>) -> (i32, i32) {
    %c0_i32 = arith.constant 0 : i32
    %c0_i32_0 = arith.constant 0 : i32
    %c0_i32_1 = arith.constant 0 : i32
    return %c0_i32, %c0_i32_0 : i32, i32
  }
  func.func @transform_4(%arg0: i32, %arg1: memref<28xi32, #tpu.memory_space<smem>>, %arg2: memref<28xi32, #tpu.memory_space<smem>>, %arg3: memref<28xi32, #tpu.memory_space<smem>>) -> (i32, i32) {
    %c0_i32 = arith.constant 0 : i32
    %c0_i32_0 = arith.constant 0 : i32
    %c0_i32_1 = arith.constant 0 : i32
    return %c0_i32, %c0_i32_0 : i32, i32
  }
  func.func @transform_5(%arg0: i32, %arg1: memref<28xi32, #tpu.memory_space<smem>>, %arg2: memref<28xi32, #tpu.memory_space<smem>>, %arg3: memref<28xi32, #tpu.memory_space<smem>>) -> (i32, i32, i32) {
    %0 = arith.index_cast %arg0 : i32 to index
    %1 = memref.load %arg1[%0] : memref<28xi32, #tpu.memory_space<smem>>
    %c0_i32 = arith.constant 0 : i32
    %c0_i32_0 = arith.constant 0 : i32
    %c0_i32_1 = arith.constant 0 : i32
    return %1, %c0_i32, %c0_i32_0 : i32, i32, i32
  }
  func.func @transform_6(%arg0: i32, %arg1: memref<28xi32, #tpu.memory_space<smem>>, %arg2: memref<28xi32, #tpu.memory_space<smem>>, %arg3: memref<28xi32, #tpu.memory_space<smem>>) -> (i32, i32, i32) {
    %0 = arith.index_cast %arg0 : i32 to index
    %1 = memref.load %arg1[%0] : memref<28xi32, #tpu.memory_space<smem>>
    %c0_i32 = arith.constant 0 : i32
    %c0_i32_0 = arith.constant 0 : i32
    %c0_i32_1 = arith.constant 0 : i32
    return %1, %c0_i32, %c0_i32_0 : i32, i32, i32
  }
  func.func @transform_7(%arg0: i32, %arg1: memref<28xi32, #tpu.memory_space<smem>>, %arg2: memref<28xi32, #tpu.memory_space<smem>>, %arg3: memref<28xi32, #tpu.memory_space<smem>>) -> (i32, i32) {
    %c0_i32 = arith.constant 0 : i32
    %c0_i32_0 = arith.constant 0 : i32
    %c0_i32_1 = arith.constant 0 : i32
    return %c0_i32, %c0_i32_0 : i32, i32
  }
  func.func @transform_8(%arg0: i32, %arg1: memref<28xi32, #tpu.memory_space<smem>>, %arg2: memref<28xi32, #tpu.memory_space<smem>>, %arg3: memref<28xi32, #tpu.memory_space<smem>>) -> (i32, i32) {
    %c0_i32 = arith.constant 0 : i32
    %c0_i32_0 = arith.constant 0 : i32
    %c0_i32_1 = arith.constant 0 : i32
    return %c0_i32, %c0_i32_0 : i32, i32
  }
  func.func @transform_9(%arg0: i32, %arg1: memref<28xi32, #tpu.memory_space<smem>>, %arg2: memref<28xi32, #tpu.memory_space<smem>>, %arg3: memref<28xi32, #tpu.memory_space<smem>>) -> (i32, i32, i32) {
    %c0_i32 = arith.constant 0 : i32
    %c0_i32_0 = arith.constant 0 : i32
    %c0_i32_1 = arith.constant 0 : i32
    return %arg0, %c0_i32, %c0_i32_0 : i32, i32, i32
  }
}

</mosaic_0001>

<llo_original>
// kernel: tpu_custom_call.1
$region0: #{tpu_custom_call.1}
  #allocation0 [shape = 'u32[]', space=smem, size = 0x4, offset = 0x4, fixed_abs, tag = 'smem constant byte address 0x4 - core index']
  #allocation1 [shape = 'u32[144,128]{1,0:T(1,128)}', space=vmem, size = 0x12000, scoped, tag = 'internal scratch']
  #allocation2 [shape = 'f32[8,128]{1,0:T(8,128)}', space=vmem, size = 0x1000, scoped, tag = 'scratch operand']
  #allocation3 [shape = 's32[1]{0}', space=sflag, size = 0x4, scoped, tag = 'scoped memory for tpu_custom_call.1']
  #allocation4 [shape = 'u8[512]{0}', space=smem, size = 0x200, scoped, tag = 'prefetched SMEM operand 0']
  #allocation5 [shape = 'u8[512]{0}', space=smem, size = 0x200, scoped, tag = 'prefetched SMEM operand 1']
  #allocation6 [shape = 'u8[512]{0}', space=smem, size = 0x200, scoped, tag = 'prefetched SMEM operand 2']
  %s0 = inlined_call_operand.vmem [shape: s32[28], index: 0, kind: input, shape index: {}]
  %s1 = inlined_call_operand.vmem [shape: s32[28], index: 1, kind: input, shape index: {}]
  %s2 = inlined_call_operand.hbm [shape: s32[28], index: 2, kind: input, shape index: {}]
  %s3 = inlined_call_operand.vmem [shape: s32[8,1], index: 3, kind: input, shape index: {}]
  %s4 = inlined_call_operand.vmem [shape: f32[128,16], index: 4, kind: input, shape index: {}]
  %s5 = inlined_call_operand.vmem [shape: f32[16,128], index: 5, kind: input, shape index: {}]
  %s6 = inlined_call_operand.hbm [shape: f32[32,128], index: 6, kind: input, shape index: {}]
  %s7 = inlined_call_operand.hbm [shape: f32[1,128], index: 7, kind: input, shape index: {}]
  %s8 = inlined_call_operand.vmem [shape: f32[5,32,128], index: 8, kind: input, shape index: {}]
  %s9 = inlined_call_operand.vmem [shape: f32[5,1,128], index: 9, kind: input, shape index: {}]
  %s10 = inlined_call_operand.hbm [shape: f32[8,32], index: 10, kind: output, shape index: {0}]
  %s11 = inlined_call_operand.hbm [shape: f32[8,32], index: 11, kind: output, shape index: {1}]
  %s12 = inlined_call_operand.hbm [shape: f32[28,8,128], index: 12, kind: output, shape index: {2}]
  %13 = xla_tuple %s10, %s11, %s12
  %s14 = sld [smem:[#allocation0]]
  $region89: #{tpu_custom_call.1} parent=0
    _
  %s16 = ssub.s32 1, %s14
  %s17 = scalar_select 0, %s16, %s14
  %s18 = sshll.u32 %s0, 4
  %s19 = int_to_ptr.vmem [resolvable:$true] %s18
  %21 = dma.vmem_to_smem %s19, 16, [#allocation4], [#allocation3]
  %s22 = sshll.u32 %s1, 4
  %s23 = int_to_ptr.vmem [resolvable:$true] %s22
  %25 = dma.vmem_to_smem %s23, 16, [#allocation5], [#allocation3]
  %27 = dma.hbm_to_smem %s2, 16, [#allocation6], [#allocation3]
  %28 = dma.done [#allocation3], 48
  %29 = sfence
  $region1: #{tpu_custom_call.1} parent=0
    #allocation7 [shape = 'u8[16384]{0}', space=vmem, size = 0x4000, scoped, tag = 'input window, operand 6, single buffered']
    #allocation8 [shape = 's32[2]{0}', space=sflag, size = 0x8, scoped, tag = 'scoped memory for tpu_custom_call.1']
    #allocation9 [shape = 's32[2]{0}', space=sflag, size = 0x8, scoped, tag = 'scoped memory for tpu_custom_call.1']
    #allocation10 [shape = 'u8[512]{0}', space=vmem, size = 0x400, scoped, tag = 'input window, operand 7, single buffered']
    #allocation11 [shape = 's32[1]{0}', space=sflag, size = 0x4, scoped, tag = 'scoped memory for tpu_custom_call.1']
    #allocation12 [shape = 'u8[4096]{0}', space=vmem, size = 0x1000, scoped, tag = 'output window, operand 0, single buffered']
    #allocation13 [shape = 'u8[4096]{0}', space=vmem, size = 0x1000, scoped, tag = 'output window, operand 1, single buffered']
    #allocation14 [shape = 's32[1]{0}', space=sflag, size = 0x4, scoped, tag = 'scoped memory for tpu_custom_call.1']
    #allocation15 [shape = 'u8[8192]{0}', space=vmem, size = 0x2000, scoped, tag = 'output window, operand 2']
    %30 = vsyncpa [#allocation8], 0
    %31 = vsyncpa [#allocation11], 0
    %32 = vsyncpa [#allocation9], 0
    %33 = vsyncpa [#allocation14], 0
    loop: start=0, step=1, limit=30
    $region2: #{tpu_custom_call.1} parent=1 // loop_pre_header
      _
    $region3: #{tpu_custom_call.1} parent=1 // loop_header
      %s35 = sphi 0, %s39
      %p36 = scmp.ge.s32.totalorder %s35, 30
      %s43 = sphi 0, %s43
      %s45 = sphi 0, %s43
      %s46 = sphi 0, %s45
      %s60 = sphi 0, %s46
      %s64 = sphi 0, %s64
      %s66 = sphi 0, %s64
      %s67 = sphi 0, %s66
      %s81 = sphi 0, %s67
      %s85 = sphi 0, %s85
      %s87 = sphi 0, %s85
      %s88 = sphi 0, %s87
      %s102 = sphi 0, %s88
      %s106 = sphi 0, %s106
      %s108 = sphi 0, %s106
      %s109 = sphi 0, %s108
      %s123 = sphi 0, %s109
      %s127 = sphi 0, %s127
      %s129 = sphi 0, %s127
      %s130 = sphi 0, %s129
      %s144 = sphi 0, %s130
      %s152 = sphi 0, %s154
      %s155 = sphi 0, %s152
      %s156 = sphi 0, %s155
      %s172 = sphi 0, %s156
      %s180 = sphi 0, %s182
      %s183 = sphi 0, %s180
      %s184 = sphi 0, %s183
      %s200 = sphi 0, %s184
      %s204 = sphi 0, %s204
      %s206 = sphi 0, %s204
      %s207 = sphi 0, %s206
      %s221 = sphi 0, %s207
      %s225 = sphi 0, %s225
      %s227 = sphi 0, %s225
      %s228 = sphi 0, %s227
      %s242 = sphi 0, %s228
      %s248 = sphi 0, %s250
      %s251 = sphi 0, %s248
      %s252 = sphi 0, %s251
      %s268 = sphi 0, %s252
    $region4: #{tpu_custom_call.1} parent=1 // loop_header_branch
      %38 = sbr.rel (%p36) target = $region8
    $region5: #{tpu_custom_call.1} parent=1 // loop_body
      %s40 = ssub.s32 %s35, 1
      %s41 = ssub.s32 %s35, 2
      %s42 = sadd.s32 %s35, 1
      %s44 = sadd.s32 %s43, 1
      %p47 = scmp.eq.s32.totalorder %s35, 27
      %p48 = scmp.ne.s32.totalorder %s43, %s45
      %p49 = scmp.eq.s32.totalorder %s35, 0
      %p50 = por %p48, %p49
      %p51 = scmp.ne.s32.totalorder %s43, %s45
      %p52 = scmp.eq.s32.totalorder %s40, 27
      %p53 = por %p51, %p52
      %p54 = scmp.ne.s32.totalorder %s45, %s46
      %p55 = scmp.eq.s32.totalorder %s40, 0
      %p56 = por %p54, %p55
      %p57 = scmp.ne.s32.totalorder %s45, %s46
      %p58 = scmp.eq.s32.totalorder %s41, 27
      %p59 = por %p57, %p58
      %p61 = scmp.ne.s32.totalorder %s46, %s60
      %p62 = scmp.eq.s32.totalorder %s41, 0
      %p63 = por %p61, %p62
      %s65 = sadd.s32 %s64, 1
      %p68 = scmp.eq.s32.totalorder %s35, 27
      %p69 = scmp.ne.s32.totalorder %s64, %s66
      %p70 = scmp.eq.s32.totalorder %s35, 0
      %p71 = por %p69, %p70
      %p72 = scmp.ne.s32.totalorder %s64, %s66
      %p73 = scmp.eq.s32.totalorder %s40, 27
      %p74 = por %p72, %p73
      %p75 = scmp.ne.s32.totalorder %s66, %s67
      %p76 = scmp.eq.s32.totalorder %s40, 0
      %p77 = por %p75, %p76
      %p78 = scmp.ne.s32.totalorder %s66, %s67
      %p79 = scmp.eq.s32.totalorder %s41, 27
      %p80 = por %p78, %p79
      %p82 = scmp.ne.s32.totalorder %s67, %s81
      %p83 = scmp.eq.s32.totalorder %s41, 0
      %p84 = por %p82, %p83
      %s86 = sadd.s32 %s85, 1
      %p89 = scmp.eq.s32.totalorder %s35, 27
      %p90 = scmp.ne.s32.totalorder %s85, %s87
      %p91 = scmp.eq.s32.totalorder %s35, 0
      %p92 = por %p90, %p91
      %p93 = scmp.ne.s32.totalorder %s85, %s87
      %p94 = scmp.eq.s32.totalorder %s40, 27
      %p95 = por %p93, %p94
      %p96 = scmp.ne.s32.totalorder %s87, %s88
      %p97 = scmp.eq.s32.totalorder %s40, 0
      %p98 = por %p96, %p97
      %p99 = scmp.ne.s32.totalorder %s87, %s88
      %p100 = scmp.eq.s32.totalorder %s41, 27
      %p101 = por %p99, %p100
      %p103 = scmp.ne.s32.totalorder %s88, %s102
      %p104 = scmp.eq.s32.totalorder %s41, 0
      %p105 = por %p103, %p104
      %s107 = sadd.s32 %s106, 1
      %p110 = scmp.eq.s32.totalorder %s35, 27
      %p111 = scmp.ne.s32.totalorder %s106, %s108
      %p112 = scmp.eq.s32.totalorder %s35, 0
      %p113 = por %p111, %p112
      %p114 = scmp.ne.s32.totalorder %s106, %s108
      %p115 = scmp.eq.s32.totalorder %s40, 27
      %p116 = por %p114, %p115
      %p117 = scmp.ne.s32.totalorder %s108, %s109
      %p118 = scmp.eq.s32.totalorder %s40, 0
      %p119 = por %p117, %p118
      %p120 = scmp.ne.s32.totalorder %s108, %s109
      %p121 = scmp.eq.s32.totalorder %s41, 27
      %p122 = por %p120, %p121
      %p124 = scmp.ne.s32.totalorder %s109, %s123
      %p125 = scmp.eq.s32.totalorder %s41, 0
      %p126 = por %p124, %p125
      %s128 = sadd.s32 %s127, 1
      %p131 = scmp.eq.s32.totalorder %s35, 27
      %p132 = scmp.ne.s32.totalorder %s127, %s129
      %p133 = scmp.eq.s32.totalorder %s35, 0
      %p134 = por %p132, %p133
      %p135 = scmp.ne.s32.totalorder %s127, %s129
      %p136 = scmp.eq.s32.totalorder %s40, 27
      %p137 = por %p135, %p136
      %p138 = scmp.ne.s32.totalorder %s129, %s130
      %p139 = scmp.eq.s32.totalorder %s40, 0
      %p140 = por %p138, %p139
      %p141 = scmp.ne.s32.totalorder %s129, %s130
      %p142 = scmp.eq.s32.totalorder %s41, 27
      %p143 = por %p141, %p142
      %p145 = scmp.ne.s32.totalorder %s130, %s144
      %p146 = scmp.eq.s32.totalorder %s41, 0
      %p147 = por %p145, %p146
      %s148 = sld [smem:[#allocation4 + %s35]]
      %s149 = sld [smem:[#allocation4 + %s42]]
      %s150 = ssub.s32 %s148, %s149
      %p151 = scmp.eq.s32.totalorder %s150, 0
      %s153 = sadd.s32 %s152, 1
      %s154 = scalar_select %p151, %s152, %s153
      %p157 = pneg %p151
      %p158 = scmp.eq.s32.totalorder %s35, 27
      %p159 = por %p157, %p158
      %p160 = scmp.ne.s32.totalorder %s152, %s155
      %p161 = scmp.eq.s32.totalorder %s35, 0
      %p162 = por %p160, %p161
      %p163 = scmp.ne.s32.totalorder %s152, %s155
      %p164 = scmp.eq.s32.totalorder %s40, 27
      %p165 = por %p163, %p164
      %p166 = scmp.ne.s32.totalorder %s155, %s156
      %p167 = scmp.eq.s32.totalorder %s40, 0
      %p168 = por %p166, %p167
      %p169 = scmp.ne.s32.totalorder %s155, %s156
      %p170 = scmp.eq.s32.totalorder %s41, 27
      %p171 = por %p169, %p170
      %p173 = scmp.ne.s32.totalorder %s156, %s172
      %p174 = scmp.eq.s32.totalorder %s41, 0
      %p175 = por %p173, %p174
      %s176 = sld [smem:[#allocation4 + %s35]]
      %s177 = sld [smem:[#allocation4 + %s42]]
      %s178 = ssub.s32 %s176, %s177
      %p179 = scmp.eq.s32.totalorder %s178, 0
      %s181 = sadd.s32 %s180, 1
      %s182 = scalar_select %p179, %s180, %s181
      %p185 = pneg %p179
      %p186 = scmp.eq.s32.totalorder %s35, 27
      %p187 = por %p185, %p186
      %p188 = scmp.ne.s32.totalorder %s180, %s183
      %p189 = scmp.eq.s32.totalorder %s35, 0
      %p190 = por %p188, %p189
      %p191 = scmp.ne.s32.totalorder %s180, %s183
      %p192 = scmp.eq.s32.totalorder %s40, 27
      %p193 = por %p191, %p192
      %p194 = scmp.ne.s32.totalorder %s183, %s184
      %p195 = scmp.eq.s32.totalorder %s40, 0
      %p196 = por %p194, %p195
      %p197 = scmp.ne.s32.totalorder %s183, %s184
      %p198 = scmp.eq.s32.totalorder %s41, 27
      %p199 = por %p197, %p198
      %p201 = scmp.ne.s32.totalorder %s184, %s200
      %p202 = scmp.eq.s32.totalorder %s41, 0
      %p203 = por %p201, %p202
      %s205 = sadd.s32 %s204, 1
      %p208 = scmp.eq.s32.totalorder %s35, 27
      %p209 = scmp.ne.s32.totalorder %s204, %s206
      %p210 = scmp.eq.s32.totalorder %s35, 0
      %p211 = por %p209, %p210
      %p212 = scmp.ne.s32.totalorder %s204, %s206
      %p213 = scmp.eq.s32.totalorder %s40, 27
      %p214 = por %p212, %p213
      %p215 = scmp.ne.s32.totalorder %s206, %s207
      %p216 = scmp.eq.s32.totalorder %s40, 0
      %p217 = por %p215, %p216
      %p218 = scmp.ne.s32.totalorder %s206, %s207
      %p219 = scmp.eq.s32.totalorder %s41, 27
      %p220 = por %p218, %p219
      %p222 = scmp.ne.s32.totalorder %s207, %s221
      %p223 = scmp.eq.s32.totalorder %s41, 0
      %p224 = por %p222, %p223
      %s226 = sadd.s32 %s225, 1
      %p229 = scmp.eq.s32.totalorder %s35, 27
      %p230 = scmp.ne.s32.totalorder %s225, %s227
      %p231 = scmp.eq.s32.totalorder %s35, 0
      %p232 = por %p230, %p231
      %p233 = scmp.ne.s32.totalorder %s225, %s227
      %p234 = scmp.eq.s32.totalorder %s40, 27
      %p235 = por %p233, %p234
      %p236 = scmp.ne.s32.totalorder %s227, %s228
      %p237 = scmp.eq.s32.totalorder %s40, 0
      %p238 = por %p236, %p237
      %p239 = scmp.ne.s32.totalorder %s227, %s228
      %p240 = scmp.eq.s32.totalorder %s41, 27
      %p241 = por %p239, %p240
      %p243 = scmp.ne.s32.totalorder %s228, %s242
      %p244 = scmp.eq.s32.totalorder %s41, 0
      %p245 = por %p243, %p244
      %s246 = ssub.s32 %s35, %s42
      %p247 = scmp.eq.s32.totalorder %s246, 0
      %s249 = sadd.s32 %s248, 1
      %s250 = scalar_select %p247, %s248, %s249
      %p253 = pneg %p247
      %p254 = scmp.eq.s32.totalorder %s35, 27
      %p255 = por %p253, %p254
      %p256 = scmp.ne.s32.totalorder %s248, %s251
      %p257 = scmp.eq.s32.totalorder %s35, 0
      %p258 = por %p256, %p257
      %p259 = scmp.ne.s32.totalorder %s248, %s251
      %p260 = scmp.eq.s32.totalorder %s40, 27
      %p261 = por %p259, %p260
      %p262 = scmp.ne.s32.totalorder %s251, %s252
      %p263 = scmp.eq.s32.totalorder %s40, 0
      %p264 = por %p262, %p263
      %p265 = scmp.ne.s32.totalorder %s251, %s252
      %p266 = scmp.eq.s32.totalorder %s41, 27
      %p267 = por %p265, %p266
      %p269 = scmp.ne.s32.totalorder %s252, %s268
      %p270 = scmp.eq.s32.totalorder %s41, 0
      %p271 = por %p269, %p270
      %p272 = scmp.le.s32.totalorder 1, %s35
      %p273 = scmp.lt.s32.totalorder %s35, 29
      %p274 = pnand %p272, %p273
      %p275 = pneg %p274
      // Predicated region
      $region9: #{tpu_custom_call.1} parent=5 // pred_check
        _
      $region10: #{tpu_custom_call.1} parent=5 // pred_check_branch
        %277 = sbr.rel (%p274) target = $region12
      $region11: #{tpu_custom_call.1} parent=5 // pred_region
        %s278 = ssub.s32 %s35, 1
        // Predicated region
        $region13: #{tpu_custom_call.1} parent=11 // pred_check
          %p279 = pneg %p56
        $region14: #{tpu_custom_call.1} parent=11 // pred_check_branch
          %281 = sbr.rel (%p279) target = $region16
        $region15: #{tpu_custom_call.1} parent=11 // pred_region
          _
        $region16: #{tpu_custom_call.1} parent=11 // pred_fallthru
          _
        // Predicated region
        $region17: #{tpu_custom_call.1} parent=11 // pred_check
          %p282 = pneg %p77
        $region18: #{tpu_custom_call.1} parent=11 // pred_check_branch
          %284 = sbr.rel (%p282) target = $region20
        $region19: #{tpu_custom_call.1} parent=11 // pred_region
          _
        $region20: #{tpu_custom_call.1} parent=11 // pred_fallthru
          _
        // Predicated region
        $region21: #{tpu_custom_call.1} parent=11 // pred_check
          %p285 = pneg %p98
        $region22: #{tpu_custom_call.1} parent=11 // pred_check_branch
          %287 = sbr.rel (%p285) target = $region24
        $region23: #{tpu_custom_call.1} parent=11 // pred_region
          _
        $region24: #{tpu_custom_call.1} parent=11 // pred_fallthru
          _
        // Predicated region
        $region25: #{tpu_custom_call.1} parent=11 // pred_check
          %p288 = pneg %p119
        $region26: #{tpu_custom_call.1} parent=11 // pred_check_branch
          %290 = sbr.rel (%p288) target = $region28
        $region27: #{tpu_custom_call.1} parent=11 // pred_region
          %s292 = ssub.s32 512, 512
          %293 = vsyncadd [#allocation8], %s292
          %s294 = sshll.u32 [#allocation7], 4
          %s295 = int_to_ptr.vmem [resolvable:$true] %s294
          %300 = dma.hbm_to_vmem [thread:$0]  %s6, 512, %s295, [#allocation8], 128, 128, 8
        $region28: #{tpu_custom_call.1} parent=11 // pred_fallthru
          _
        // Predicated region
        $region29: #{tpu_custom_call.1} parent=11 // pred_check
          %p301 = pneg %p140
        $region30: #{tpu_custom_call.1} parent=11 // pred_check_branch
          %303 = sbr.rel (%p301) target = $region32
        $region31: #{tpu_custom_call.1} parent=11 // pred_region
          %s305 = ssub.s32 16, 16
          %306 = vsyncadd [#allocation11], %s305
          %s308 = sshll.u32 [#allocation10], 4
          %s309 = int_to_ptr.vmem [resolvable:$true] %s308
          %311 = dma.hbm_to_vmem [thread:$0]  %s7, 16, %s309, [#allocation11]
        $region32: #{tpu_custom_call.1} parent=11 // pred_fallthru
          _
      $region12: #{tpu_custom_call.1} parent=5 // pred_fallthru
        _
      %p312 = scmp.lt.s32.totalorder %s35, 28
      // Predicated region
      $region33: #{tpu_custom_call.1} parent=5 // pred_check
        %p313 = pneg %p312
      $region34: #{tpu_custom_call.1} parent=5 // pred_check_branch
        %315 = sbr.rel (%p313) target = $region36
      $region35: #{tpu_custom_call.1} parent=5 // pred_region
        // Predicated region
        $region37: #{tpu_custom_call.1} parent=35 // pred_check
          %p316 = pneg %p162
        $region38: #{tpu_custom_call.1} parent=35 // pred_check_branch
          %318 = sbr.rel (%p316) target = $region40
        $region39: #{tpu_custom_call.1} parent=35 // pred_region
          %s319 = sld [smem:[#allocation4 + %s35]]
          %p320 = scmp.lt.s32.totalorder %s319, 4
          %s321 = scalar_select %p320, %s319, 4
          %s322 = smul.addr %s321, 4
          %s323 = smul.addr %s322, 8
          %s324 = scalar_lea.vmem %s8, %s323
          %s325 = sld [smem:[#allocation4 + %s35]]
        $region40: #{tpu_custom_call.1} parent=35 // pred_fallthru
          _
        // Predicated region
        $region41: #{tpu_custom_call.1} parent=35 // pred_check
          %p326 = pneg %p190
        $region42: #{tpu_custom_call.1} parent=35 // pred_check_branch
          %328 = sbr.rel (%p326) target = $region44
        $region43: #{tpu_custom_call.1} parent=35 // pred_region
          %s329 = sld [smem:[#allocation4 + %s35]]
          %p330 = scmp.lt.s32.totalorder %s329, 4
          %s331 = scalar_select %p330, %s329, 4
          %s332 = scalar_lea.vmem %s9, %s331
          %s333 = sld [smem:[#allocation4 + %s35]]
        $region44: #{tpu_custom_call.1} parent=35 // pred_fallthru
          _
      $region36: #{tpu_custom_call.1} parent=5 // pred_fallthru
        _
      %p334 = scmp.le.s32.totalorder 1, %s35
      %p335 = scmp.lt.s32.totalorder %s35, 29
      %p336 = pnand %p334, %p335
      %p337 = pneg %p336
      // Predicated region
      $region45: #{tpu_custom_call.1} parent=5 // pred_check
        _
      $region46: #{tpu_custom_call.1} parent=5 // pred_check_branch
        %339 = sbr.rel (%p336) target = $region48
      $region47: #{tpu_custom_call.1} parent=5 // pred_region
        %s340 = ssub.s32 %s35, 1
        // Predicated region
        $region49: #{tpu_custom_call.1} parent=47 // pred_check
          %p341 = pneg %p119
        $region50: #{tpu_custom_call.1} parent=47 // pred_check_branch
          %343 = sbr.rel (%p341) target = $region52
        $region51: #{tpu_custom_call.1} parent=47 // pred_region
          %344 = dma.done [#allocation8], 512
        $region52: #{tpu_custom_call.1} parent=47 // pred_fallthru
          _
        // Predicated region
        $region53: #{tpu_custom_call.1} parent=47 // pred_check
          %p345 = pneg %p140
        $region54: #{tpu_custom_call.1} parent=47 // pred_check_branch
          %347 = sbr.rel (%p345) target = $region56
        $region55: #{tpu_custom_call.1} parent=47 // pred_region
          %348 = dma.done [#allocation11], 16
        $region56: #{tpu_custom_call.1} parent=47 // pred_fallthru
          _
        %p349 = pneg %p56
        %p350 = pneg %p53
        %p351 = pneg %p77
        %p352 = pneg %p74
        %p353 = pneg %p98
        %p354 = pneg %p95
        %p355 = pneg %p119
        %p356 = pneg %p116
        %p357 = pneg %p140
        %p358 = pneg %p137
        %s359 = sld [smem:[#allocation4 + %s40]]
        %p360 = scmp.lt.s32.totalorder %s359, 4
        %s361 = scalar_select %p360, %s359, 4
        %s362 = smul.addr %s361, 4
        %s363 = smul.addr %s362, 8
        %s364 = scalar_lea.vmem %s8, %s363
        %p365 = pneg %p168
        %p366 = pneg %p165
        %s367 = sld [smem:[#allocation4 + %s40]]
        %p368 = scmp.lt.s32.totalorder %s367, 4
        %s369 = scalar_select %p368, %s367, 4
        %s370 = scalar_lea.vmem %s9, %s369
        %p371 = pneg %p196
        %p372 = pneg %p193
        %p373 = pneg %p217
        %p374 = pneg %p214
        %p375 = pneg %p238
        %p376 = pneg %p235
        %p377 = pneg %p264
        %p378 = pneg %p261
        %s379 = sand.u32 %s40, 1
        %s380 = scalar_lea.sflag [#allocation9], %s379
        %s381 = sand.u32 %s251, 1
        %s382 = smul.addr %s381, 8
        %s383 = scalar_lea.vmem [#allocation15], %s382
        %s384 = sld [smem:[#allocation4 + %s40]]
        %p385 = scmp.lt.s32.totalorder %s384, 4
        %s386 = scalar_select %p385, %s384, 4
        %s387 = smul.addr %s386, 4
        %s388 = smul.addr %s387, 8
        %s389 = scalar_lea.vmem %s8, %s388
        %s390 = sld [smem:[#allocation4 + %s40]]
        %s391 = sld [smem:[#allocation4 + %s40]]
        %p392 = scmp.lt.s32.totalorder %s391, 4
        %s393 = scalar_select %p392, %s391, 4
        %s394 = scalar_lea.vmem %s9, %s393
        %s395 = sld [smem:[#allocation4 + %s40]]
        %v396 = vlaneseq
        %v397 = vand.u32 %v396, 127
        %v398 = vcvt.s32.f32 %v397
        %p399 = scmp.eq.s32.totalorder %s40, 0
        // Predicated region
        $region57: #{tpu_custom_call.1} parent=47 // pred_check
          %p400 = pneg %p399
        $region58: #{tpu_custom_call.1} parent=47 // pred_check_branch
          %402 = sbr.rel (%p400) target = $region60
        $region59: #{tpu_custom_call.1} parent=47 // pred_region
          %vm403 = vcmask 261120
          %404 = vst.msk [vmem:[#allocation12] sm:$0xff] %vm403, 0.0
          %405 = vst.msk [vmem:[#allocation13] sm:$0xff] %vm403, 0.0
          %v406 = vld [vmem:[%s3] sm:$0xff]
          %407 = vset.pattern.permute.xlu0 0
          %408 = vperm.xlu0 %407, %v406
          %v409 = vpop.permute.xlu0 %408
          %vm410 = vcmp.eq.s32.totalorder %v397, %v409
          %v411 = vsel %vm410, 1, 0
          %v412 = vcvt.s32.f32 %v411
          %413 = vst [vmem:[#allocation2] sm:$0xff] %v412
        $region60: #{tpu_custom_call.1} parent=47 // pred_fallthru
          _
        %v414 = vld [vmem:[#allocation2] sm:$0xff]
        %v415 = vld [vmem:[%s4] sm:$0xff]
        %v416 = vld [vmem:[%s4 + $0x8] sm:$0xff]
        %v417 = vld [vmem:[%s4 + $0x10] sm:$0xff]
        %v418 = vld [vmem:[%s4 + $0x18] sm:$0xff]
        %v419 = vld [vmem:[%s4 + $0x20] sm:$0xff]
        %v420 = vld [vmem:[%s4 + $0x28] sm:$0xff]
        %v421 = vld [vmem:[%s4 + $0x30] sm:$0xff]
        %v422 = vld [vmem:[%s4 + $0x38] sm:$0xff]
        %v423 = vld [vmem:[%s4 + $0x40] sm:$0xff]
        %v424 = vld [vmem:[%s4 + $0x48] sm:$0xff]
        %v425 = vld [vmem:[%s4 + $0x50] sm:$0xff]
        %v426 = vld [vmem:[%s4 + $0x58] sm:$0xff]
        %v427 = vld [vmem:[%s4 + $0x60] sm:$0xff]
        %v428 = vld [vmem:[%s4 + $0x68] sm:$0xff]
        %v429 = vld [vmem:[%s4 + $0x70] sm:$0xff]
        %v430 = vld [vmem:[%s4 + $0x78] sm:$0xff]
        %431 = vmatprep.subr.mxu0 0.0
        %432 = vmatpush1.msra.mxu0 %v415
        %433 = vmatprep.subr.mxu0 0.0
        %434 = vmatpush1.msra.mxu0 %v416
        %435 = vmatprep.subr.mxu0 0.0
        %436 = vmatpush1.msra.mxu0 %v417
        %437 = vmatprep.subr.mxu0 0.0
        %438 = vmatpush1.msra.mxu0 %v418
        %439 = vmatprep.subr.mxu0 0.0
        %440 = vmatpush1.msra.mxu0 %v419
        %441 = vmatprep.subr.mxu0 0.0
        %442 = vmatpush1.msra.mxu0 %v420
        %443 = vmatprep.subr.mxu0 0.0
        %444 = vmatpush1.msra.mxu0 %v421
        %445 = vmatprep.subr.mxu0 0.0
        %446 = vmatpush1.msra.mxu0 %v422
        %447 = vmatprep.subr.mxu0 0.0
        %448 = vmatpush1.msra.mxu0 %v423
        %449 = vmatprep.subr.mxu0 0.0
        %450 = vmatpush1.msra.mxu0 %v424
        %451 = vmatprep.subr.mxu0 0.0
        %452 = vmatpush1.msra.mxu0 %v425
        %453 = vmatprep.subr.mxu0 0.0
        %454 = vmatpush1.msra.mxu0 %v426
        %455 = vmatprep.subr.mxu0 0.0
        %456 = vmatpush1.msra.mxu0 %v427
        %457 = vmatprep.subr.mxu0 0.0
        %458 = vmatpush1.msra.mxu0 %v428
        %459 = vmatprep.subr.mxu0 0.0
        %460 = vmatpush1.msra.mxu0 %v429
        %461 = vmatprep.subr.mxu0 0.0
        %462 = vmatpush1.msra.mxu0 %v430
        %463 = vmatprep.subr.mxu0 0.0
        %464 = vmatpush1.msra.mxu0 0.0
        %465 = vmatprep.subr.mxu0 0.0
        %466 = vmatpush1.msra.mxu0 0.0
        %467 = vmatprep.subr.mxu0 0.0
        %468 = vmatpush1.msra.mxu0 0.0
        %469 = vmatprep.subr.mxu0 0.0
        %470 = vmatpush1.msra.mxu0 0.0
        %471 = vmatprep.subr.mxu0 0.0
        %472 = vmatpush1.msra.mxu0 0.0
        %473 = vmatprep.subr.mxu0 0.0
        %474 = vmatpush1.msra.mxu0 0.0
        %475 = vmatprep.subr.mxu0 0.0
        %476 = vmatpush1.msra.mxu0 0.0
        %477 = vmatprep.subr.mxu0 0.0
        %478 = vmatpush1.msra.mxu0 0.0
        %479 = vmatprep.subr.mxu0 0.0
        %480 = vmatpush1.msra.mxu0 0.0
        %481 = vmatprep.subr.mxu0 0.0
        %482 = vmatpush1.msra.mxu0 0.0
        %483 = vmatprep.subr.mxu0 0.0
        %484 = vmatpush1.msra.mxu0 0.0
        %485 = vmatprep.subr.mxu0 0.0
        %486 = vmatpush1.msra.mxu0 0.0
        %487 = vmatprep.subr.mxu0 0.0
        %488 = vmatpush1.msra.mxu0 0.0
        %489 = vmatprep.subr.mxu0 0.0
        %490 = vmatpush1.msra.mxu0 0.0
        %491 = vmatprep.subr.mxu0 0.0
        %492 = vmatpush1.msra.mxu0 0.0
        %493 = vmatprep.subr.mxu0 0.0
        %494 = vmatpush1.msra.mxu0 0.0
        %495 = vmatprep.mubr.f32.mxu0 0.0
        %496 = vmatmul.mubr.f32.gmra.mrb[0].mxu0 %v414
        %v497 = vpop.f32.mrb[0].mxu0
        %v498 = vadd.f32 0.0, %v497
        %v499 = vpop.f32.mrb[0].mxu0
        %500 = vdwg.mxu0
        %v501 = vld [vmem:[#allocation12] sm:$0xff]
        %v502 = vld [vmem:[#allocation13] sm:$0xff]
        %v503 = vld [vmem:[%s5] sm:$0xff]
        %v504 = vld [vmem:[%s5 + $0x8] sm:$0xff]
        %v505 = vld [vmem:[#allocation7] sm:$0xff]
        %v506 = vld [vmem:[#allocation7 + $0x8] sm:$0xff]
        %v507 = vld [vmem:[#allocation7 + $0x10] sm:$0xff]
        %v508 = vld [vmem:[#allocation7 + $0x18] sm:$0xff]
        %vm509 = vcmask 261120
        %v511 = vsel %vm509, %v501, 0
        %513 = vmatprep.subr.mxu0 0.0
        %514 = vmatpush1.msra.mxu0 %v505
        %515 = vmatprep.subr.mxu0 0.0
        %516 = vmatpush1.msra.mxu0 %v506
        %517 = vmatprep.subr.mxu0 0.0
        %518 = vmatpush1.msra.mxu0 %v507
        %519 = vmatprep.subr.mxu0 0.0
        %520 = vmatpush1.msra.mxu0 %v508
        %521 = vmatprep.subr.mxu0 0.0
        %522 = vmatpush1.msra.mxu0 0.0
        %523 = vmatprep.subr.mxu0 0.0
        %524 = vmatpush1.msra.mxu0 0.0
        %525 = vmatprep.subr.mxu0 0.0
        %526 = vmatpush1.msra.mxu0 0.0
        %527 = vmatprep.subr.mxu0 0.0
        %528 = vmatpush1.msra.mxu0 0.0
        %529 = vmatprep.subr.mxu0 0.0
        %530 = vmatpush1.msra.mxu0 0.0
        %531 = vmatprep.subr.mxu0 0.0
        %532 = vmatpush1.msra.mxu0 0.0
        %533 = vmatprep.subr.mxu0 0.0
        %534 = vmatpush1.msra.mxu0 0.0
        %535 = vmatprep.subr.mxu0 0.0
        %536 = vmatpush1.msra.mxu0 0.0
        %537 = vmatprep.subr.mxu0 0.0
        %538 = vmatpush1.msra.mxu0 0.0
        %539 = vmatprep.subr.mxu0 0.0
        %540 = vmatpush1.msra.mxu0 0.0
        %541 = vmatprep.subr.mxu0 0.0
        %542 = vmatpush1.msra.mxu0 0.0
        %543 = vmatprep.subr.mxu0 0.0
        %544 = vmatpush1.msra.mxu0 0.0
        %545 = vmatprep.subr.mxu0 0.0
        %546 = vmatpush1.msra.mxu0 0.0
        %547 = vmatprep.subr.mxu0 0.0
        %548 = vmatpush1.msra.mxu0 0.0
        %549 = vmatprep.subr.mxu0 0.0
        %550 = vmatpush1.msra.mxu0 0.0
        %551 = vmatprep.subr.mxu0 0.0
        %552 = vmatpush1.msra.mxu0 0.0
        %553 = vmatprep.subr.mxu0 0.0
        %554 = vmatpush1.msra.mxu0 0.0
        %555 = vmatprep.subr.mxu0 0.0
        %556 = vmatpush1.msra.mxu0 0.0
        %557 = vmatprep.subr.mxu0 0.0
        %558 = vmatpush1.msra.mxu0 0.0
        %559 = vmatprep.subr.mxu0 0.0
        %560 = vmatpush1.msra.mxu0 0.0
        %561 = vmatprep.subr.mxu0 0.0
        %562 = vmatpush1.msra.mxu0 0.0
        %563 = vmatprep.subr.mxu0 0.0
        %564 = vmatpush1.msra.mxu0 0.0
        %565 = vmatprep.subr.mxu0 0.0
        %566 = vmatpush1.msra.mxu0 0.0
        %567 = vmatprep.subr.mxu0 0.0
        %568 = vmatpush1.msra.mxu0 0.0
        %569 = vmatprep.subr.mxu0 0.0
        %570 = vmatpush1.msra.mxu0 0.0
        %571 = vmatprep.subr.mxu0 0.0
        %572 = vmatpush1.msra.mxu0 0.0
        %573 = vmatprep.subr.mxu0 0.0
        %574 = vmatpush1.msra.mxu0 0.0
        %575 = vmatprep.subr.mxu0 0.0
        %576 = vmatpush1.msra.mxu0 0.0
        %577 = vmatprep.mubr.f32.mxu0 0.0
        %578 = vmatmul.mubr.f32.gmra.mrb[0].mxu0 %v511
        %v579 = vpop.f32.mrb[0].mxu0
        %v580 = vadd.f32 0.0, %v579
        %v581 = vpop.f32.mrb[0].mxu0
        %582 = vdwg.mxu0
        %vm583 = vcmask 130048
        %v585 = vsel %vm583, %v498, 0
        %587 = vmatprep.subr.mxu0 0.0
        %588 = vmatpush1.msra.mxu0 %v503
        %589 = vmatprep.subr.mxu0 0.0
        %590 = vmatpush1.msra.mxu0 %v504
        %591 = vmatprep.subr.mxu0 0.0
        %592 = vmatpush1.msra.mxu0 0.0
        %593 = vmatprep.subr.mxu0 0.0
        %594 = vmatpush1.msra.mxu0 0.0
        %595 = vmatprep.subr.mxu0 0.0
        %596 = vmatpush1.msra.mxu0 0.0
        %597 = vmatprep.subr.mxu0 0.0
        %598 = vmatpush1.msra.mxu0 0.0
        %599 = vmatprep.subr.mxu0 0.0
        %600 = vmatpush1.msra.mxu0 0.0
        %601 = vmatprep.subr.mxu0 0.0
        %602 = vmatpush1.msra.mxu0 0.0
        %603 = vmatprep.subr.mxu0 0.0
        %604 = vmatpush1.msra.mxu0 0.0
        %605 = vmatprep.subr.mxu0 0.0
        %606 = vmatpush1.msra.mxu0 0.0
        %607 = vmatprep.subr.mxu0 0.0
        %608 = vmatpush1.msra.mxu0 0.0
        %609 = vmatprep.subr.mxu0 0.0
        %610 = vmatpush1.msra.mxu0 0.0
        %611 = vmatprep.subr.mxu0 0.0
        %612 = vmatpush1.msra.mxu0 0.0
        %613 = vmatprep.subr.mxu0 0.0
        %614 = vmatpush1.msra.mxu0 0.0
        %615 = vmatprep.subr.mxu0 0.0
        %616 = vmatpush1.msra.mxu0 0.0
        %617 = vmatprep.subr.mxu0 0.0
        %618 = vmatpush1.msra.mxu0 0.0
        %619 = vmatprep.subr.mxu0 0.0
        %620 = vmatpush1.msra.mxu0 0.0
        %621 = vmatprep.subr.mxu0 0.0
        %622 = vmatpush1.msra.mxu0 0.0
        %623 = vmatprep.subr.mxu0 0.0
        %624 = vmatpush1.msra.mxu0 0.0
        %625 = vmatprep.subr.mxu0 0.0
        %626 = vmatpush1.msra.mxu0 0.0
        %627 = vmatprep.subr.mxu0 0.0
        %628 = vmatpush1.msra.mxu0 0.0
        %629 = vmatprep.subr.mxu0 0.0
        %630 = vmatpush1.msra.mxu0 0.0
        %631 = vmatprep.subr.mxu0 0.0
        %632 = vmatpush1.msra.mxu0 0.0
        %633 = vmatprep.subr.mxu0 0.0
        %634 = vmatpush1.msra.mxu0 0.0
        %635 = vmatprep.subr.mxu0 0.0
        %636 = vmatpush1.msra.mxu0 0.0
        %637 = vmatprep.subr.mxu0 0.0
        %638 = vmatpush1.msra.mxu0 0.0
        %639 = vmatprep.subr.mxu0 0.0
        %640 = vmatpush1.msra.mxu0 0.0
        %641 = vmatprep.subr.mxu0 0.0
        %642 = vmatpush1.msra.mxu0 0.0
        %643 = vmatprep.subr.mxu0 0.0
        %644 = vmatpush1.msra.mxu0 0.0
        %645 = vmatprep.subr.mxu0 0.0
        %646 = vmatpush1.msra.mxu0 0.0
        %647 = vmatprep.subr.mxu0 0.0
        %648 = vmatpush1.msra.mxu0 0.0
        %649 = vmatprep.subr.mxu0 0.0
        %650 = vmatpush1.msra.mxu0 0.0
        %651 = vmatprep.mubr.f32.mxu0 0.0
        %652 = vmatmul.mubr.f32.gmra.mrb[0].mxu0 %v585
        %v653 = vpop.f32.mrb[0].mxu0
        %v654 = vadd.f32 %v580, %v653
        %v655 = vpop.f32.mrb[0].mxu0
        %656 = vdwg.mxu0
        %v657 = vld [vmem:[#allocation10] sm:$0x1]
        %v659 = vlaneseq
        %v660 = vshrl.u32 %v659, 7
        %v661 = vsub.s32 0, %v660
        %v662 = vrot.slane %v657, %v661
        %v664 = vadd.f32 %v654, %v662
        %v665 = vxor.u32 %v664, 2147483648
        %v666 = vmul.f32 %v665, 1.442695
        %v667 = vpow.pop %v666
        %v668 = vadd.f32 %v667, 1.0
        %v669 = vrcp.pop %v668
        %v670 = vmul.f32 1.0, %v669
        %v671 = vtanh.pop %v664
        %673 = vrot.lane.b32.xlu0 %v502, 32
        %v674 = vpop.permute.xlu0 %673
        %v676 = vmul.f32 %v670, %v674
        %678 = vrot.lane.b32.xlu0 %v671, 64
        %v679 = vpop.permute.xlu0 %678
        %v681 = vmul.f32 %v670, %v679
        %683 = vrot.lane.b32.xlu0 %v681, 32
        %v684 = vpop.permute.xlu0 %683
        %v686 = vadd.f32 %v676, %v684
        %v687 = vtanh.pop %v686
        %689 = vrot.lane.b32.xlu0 %v687, 64
        %v690 = vpop.permute.xlu0 %689
        %v692 = vmul.f32 %v670, %v690
        %694 = vrot.lane.b32.xlu0 %v692, 32
        %v695 = vpop.permute.xlu0 %694
        %697 = vst.msk [vmem:[#allocation12] sm:$0xff] %vm509, %v695
        %699 = vrot.lane.b32.xlu0 %v686, 96
        %v700 = vpop.permute.xlu0 %699
        %702 = vst.msk [vmem:[#allocation13] sm:$0xff] %vm509, %v700
        %v703 = vld [vmem:[%s389] sm:$0xff]
        %v704 = vld [vmem:[%s389 + $0x8] sm:$0xff]
        %v705 = vld [vmem:[%s389 + $0x10] sm:$0xff]
        %v706 = vld [vmem:[%s389 + $0x18] sm:$0xff]
        %v707 = vld [vmem:[%s394] sm:$0x1]
        %v709 = vlaneseq
        %v710 = vshrl.u32 %v709, 7
        %v711 = vsub.s32 0, %v710
        %v712 = vrot.slane %v707, %v711
        %v714 = vsel %vm509, %v695, 0
        %716 = vmatprep.subr.mxu0 0.0
        %717 = vmatpush1.msra.mxu0 %v703
        %718 = vmatprep.subr.mxu0 0.0
        %719 = vmatpush1.msra.mxu0 %v704
        %720 = vmatprep.subr.mxu0 0.0
        %721 = vmatpush1.msra.mxu0 %v705
        %722 = vmatprep.subr.mxu0 0.0
        %723 = vmatpush1.msra.mxu0 %v706
        %724 = vmatprep.subr.mxu0 0.0
        %725 = vmatpush1.msra.mxu0 0.0
        %726 = vmatprep.subr.mxu0 0.0
        %727 = vmatpush1.msra.mxu0 0.0
        %728 = vmatprep.subr.mxu0 0.0
        %729 = vmatpush1.msra.mxu0 0.0
        %730 = vmatprep.subr.mxu0 0.0
        %731 = vmatpush1.msra.mxu0 0.0
        %732 = vmatprep.subr.mxu0 0.0
        %733 = vmatpush1.msra.mxu0 0.0
        %734 = vmatprep.subr.mxu0 0.0
        %735 = vmatpush1.msra.mxu0 0.0
        %736 = vmatprep.subr.mxu0 0.0
        %737 = vmatpush1.msra.mxu0 0.0
        %738 = vmatprep.subr.mxu0 0.0
        %739 = vmatpush1.msra.mxu0 0.0
        %740 = vmatprep.subr.mxu0 0.0
        %741 = vmatpush1.msra.mxu0 0.0
        %742 = vmatprep.subr.mxu0 0.0
        %743 = vmatpush1.msra.mxu0 0.0
        %744 = vmatprep.subr.mxu0 0.0
        %745 = vmatpush1.msra.mxu0 0.0
        %746 = vmatprep.subr.mxu0 0.0
        %747 = vmatpush1.msra.mxu0 0.0
        %748 = vmatprep.subr.mxu0 0.0
        %749 = vmatpush1.msra.mxu0 0.0
        %750 = vmatprep.subr.mxu0 0.0
        %751 = vmatpush1.msra.mxu0 0.0
        %752 = vmatprep.subr.mxu0 0.0
        %753 = vmatpush1.msra.mxu0 0.0
        %754 = vmatprep.subr.mxu0 0.0
        %755 = vmatpush1.msra.mxu0 0.0
        %756 = vmatprep.subr.mxu0 0.0
        %757 = vmatpush1.msra.mxu0 0.0
        %758 = vmatprep.subr.mxu0 0.0
        %759 = vmatpush1.msra.mxu0 0.0
        %760 = vmatprep.subr.mxu0 0.0
        %761 = vmatpush1.msra.mxu0 0.0
        %762 = vmatprep.subr.mxu0 0.0
        %763 = vmatpush1.msra.mxu0 0.0
        %764 = vmatprep.subr.mxu0 0.0
        %765 = vmatpush1.msra.mxu0 0.0
        %766 = vmatprep.subr.mxu0 0.0
        %767 = vmatpush1.msra.mxu0 0.0
        %768 = vmatprep.subr.mxu0 0.0
        %769 = vmatpush1.msra.mxu0 0.0
        %770 = vmatprep.subr.mxu0 0.0
        %771 = vmatpush1.msra.mxu0 0.0
        %772 = vmatprep.subr.mxu0 0.0
        %773 = vmatpush1.msra.mxu0 0.0
        %774 = vmatprep.subr.mxu0 0.0
        %775 = vmatpush1.msra.mxu0 0.0
        %776 = vmatprep.subr.mxu0 0.0
        %777 = vmatpush1.msra.mxu0 0.0
        %778 = vmatprep.subr.mxu0 0.0
        %779 = vmatpush1.msra.mxu0 0.0
        %780 = vmatprep.mubr.f32.mxu0 0.0
        %781 = vmatmul.mubr.f32.gmra.mrb[0].mxu0 %v714
        %v782 = vpop.f32.mrb[0].mxu0
        %v783 = vadd.f32 %v712, %v782
        %v784 = vpop.f32.mrb[0].mxu0
        %785 = vdwg.mxu0
        %s786 = sld [smem:[#allocation6 + %s40]]
        %v787 = vstv %s786
        %vm788 = vcmp.lt.s32.totalorder %v397, %v787
        %v789 = vsel %vm788, %v783, -1e+30
        %790 = vst [vmem:[%s383] sm:$0xff] %v789
        %791 = vmax.xlane.f32.xlu0 %v789
        %v792 = vpop.xlane.xlu0 %791
        %vm793 = vcmp.eq.f32.partialorder %v789, %v792
        %v794 = vsel %vm793, %v398, 128.0
        %795 = vmin.xlane.f32.xlu0 %v794
        %v796 = vpop.xlane.xlu0 %795
        %s797 = sld [smem:[#allocation5 + %s40]]
        %s798 = scvt.s32.f32 %s797
        %v799 = vstv %s798
        %v800 = vadd.f32 %v796, %v799
        %vm801 = vcmp.eq.f32.partialorder %v398, %v800
        %v802 = vsel %vm801, 1, 0
        %v803 = vcvt.s32.f32 %v802
        %804 = vst [vmem:[#allocation2] sm:$0xff] %v803
        %s805 = sand.u32 %s40, 1
        %s806 = scalar_lea.sflag [#allocation9], %s805
        %s807 = sand.u32 %s251, 1
        %s808 = smul.addr %s807, 8
        %s809 = scalar_lea.vmem [#allocation15], %s808
        // Predicated region
        $region61: #{tpu_custom_call.1} parent=47 // pred_check
          %p810 = pneg %p214
        $region62: #{tpu_custom_call.1} parent=47 // pred_check_branch
          %812 = sbr.rel (%p810) target = $region64
        $region63: #{tpu_custom_call.1} parent=47 // pred_region
          %s814 = ssub.s32 128, 128
          %815 = vsyncadd [#allocation9], %s814
          %s817 = sshll.u32 [#allocation12], 4
          %s818 = int_to_ptr.vmem [resolvable:$true] %s817
          %820 = dma.vmem_to_hbm [thread:$0]  %s818, 128, %s10, [#allocation9]
        $region64: #{tpu_custom_call.1} parent=47 // pred_fallthru
          _
        // Predicated region
        $region65: #{tpu_custom_call.1} parent=47 // pred_check
          %p821 = pneg %p235
        $region66: #{tpu_custom_call.1} parent=47 // pred_check_branch
          %823 = sbr.rel (%p821) target = $region68
        $region67: #{tpu_custom_call.1} parent=47 // pred_region
          %s825 = ssub.s32 128, 128
          %826 = vsyncadd [#allocation14], %s825
          %s828 = sshll.u32 [#allocation13], 4
          %s829 = int_to_ptr.vmem [resolvable:$true] %s828
          %831 = dma.vmem_to_hbm [thread:$0]  %s829, 128, %s11, [#allocation14]
        $region68: #{tpu_custom_call.1} parent=47 // pred_fallthru
          _
        // Predicated region
        $region69: #{tpu_custom_call.1} parent=47 // pred_check
          %p832 = pneg %p261
        $region70: #{tpu_custom_call.1} parent=47 // pred_check_branch
          %834 = sbr.rel (%p832) target = $region72
        $region71: #{tpu_custom_call.1} parent=47 // pred_region
          %s836 = ssub.s32 128, 128
          %837 = vsyncadd %s806, %s836
          %s838 = smul.addr %s40, 128
          %s839 = scalar_lea.hbm %s12, %s838
          %s841 = sshll.u32 %s809, 4
          %s842 = int_to_ptr.vmem [resolvable:$true] %s841
          %844 = dma.vmem_to_hbm [thread:$0]  %s842, 128, %s839, %s806
        $region72: #{tpu_custom_call.1} parent=47 // pred_fallthru
          _
        // Predicated region
        $region73: #{tpu_custom_call.1} parent=47 // pred_check
          %p845 = pneg %p214
        $region74: #{tpu_custom_call.1} parent=47 // pred_check_branch
          %847 = sbr.rel (%p845) target = $region76
        $region75: #{tpu_custom_call.1} parent=47 // pred_region
          %848 = dma.done [#allocation9], 128
        $region76: #{tpu_custom_call.1} parent=47 // pred_fallthru
          _
        // Predicated region
        $region77: #{tpu_custom_call.1} parent=47 // pred_check
          %p849 = pneg %p235
        $region78: #{tpu_custom_call.1} parent=47 // pred_check_branch
          %851 = sbr.rel (%p849) target = $region80
        $region79: #{tpu_custom_call.1} parent=47 // pred_region
          %852 = dma.done [#allocation14], 128
        $region80: #{tpu_custom_call.1} parent=47 // pred_fallthru
          _
      $region48: #{tpu_custom_call.1} parent=5 // pred_fallthru
        _
      %p853 = scmp.le.s32.totalorder 2, %s35
      // Predicated region
      $region81: #{tpu_custom_call.1} parent=5 // pred_check
        %p854 = pneg %p853
      $region82: #{tpu_custom_call.1} parent=5 // pred_check_branch
        %856 = sbr.rel (%p854) target = $region84
      $region83: #{tpu_custom_call.1} parent=5 // pred_region
        %s857 = ssub.s32 %s35, 2
        // Predicated region
        $region85: #{tpu_custom_call.1} parent=83 // pred_check
          %p858 = pneg %p267
        $region86: #{tpu_custom_call.1} parent=83 // pred_check_branch
          %860 = sbr.rel (%p858) target = $region88
        $region87: #{tpu_custom_call.1} parent=83 // pred_region
          %s861 = sand.u32 %s41, 1
          %s862 = scalar_lea.sflag [#allocation9], %s861
          %s863 = sand.u32 %s252, 1
          %s864 = smul.addr %s863, 8
          %s865 = scalar_lea.vmem [#allocation15], %s864
          %866 = dma.done %s862, 128
        $region88: #{tpu_custom_call.1} parent=83 // pred_fallthru
          _
      $region84: #{tpu_custom_call.1} parent=5 // pred_fallthru
        _
    $region6: #{tpu_custom_call.1} parent=1 // loop_footer
      %s39 = sadd.s32 1, %s35
    $region7: #{tpu_custom_call.1} parent=1 // loop_footer_branch
      %34 = sbr.rel target = $region3
    $region8: #{tpu_custom_call.1} parent=1 // loop_exit
      _
    %867 = vsyncpa [#allocation8], 1
    %s868 = scalar_lea.sflag [#allocation8], 1
    %869 = vsyncpa %s868, 1
    %870 = vsyncpa [#allocation11], 1
    %871 = vsyncpa [#allocation9], 1
    %s872 = scalar_lea.sflag [#allocation9], 1
    %873 = vsyncpa %s872, 1
    %874 = vsyncpa [#allocation14], 1

</llo_original>
